<compile_context>
chip_gen: v6e
topology: v6e:2x2x1
jax: 0.10.0
libtpu: 0.0.40
codegen_flags: <defaults>
</compile_context>

<pallas_src>
import jax
import jax.numpy as jnp
from jax.experimental import pallas as pl
from jax.experimental.pallas import tpu as pltpu


def _denorm_kernel(x_ref, std_ref, mean_ref, o_ref):
    # out = x * std + mean on the VPU.  std/mean are either (row_tile, 1)
    # columns (broadcast across the lane axis) or (1, lane_tile) rows
    # (broadcast across the sublane axis); jnp broadcasting covers both.
    x = x_ref[...].astype(jnp.float32)
    o_ref[...] = (x * std_ref[...] + mean_ref[...]).astype(o_ref.dtype)


def _round_down(v, m):
    return (v // m) * m


def _cdiv(a, b):
    return -(-a // b)


def custom_normalization(x_nchw, mean_c, std_c, *, target_tile_bytes=8 << 20):
    """Replicates customNormalization.forward: x * std + mean.

    x_nchw : (N, C, H, W) array (PyTorch NCHW convention)
    mean_c : (C,) per-channel mean
    std_c  : (C,) per-channel std
    """
    N, C, H, W = x_nchw.shape
    dtype = x_nchw.dtype
    dtype_bytes = jnp.dtype(dtype).itemsize
    pack = max(8, 32 // dtype_bytes)        # sublane pack: 8 f32 / 16 bf16 / 32 i8
    spatial = H * W

    # ---- layout: always lane-dense, pure reshapes only (no transposes) ----
    if spatial >= 128:
        # (N*C, H*W): one row per (n, c); per-row (rows, 1) f32 params
        # broadcast across the lane axis inside the kernel.
        rows, lanes = N * C, spatial
        x2d = x_nchw.reshape(rows, lanes)
        std_arr = jnp.tile(std_c.reshape(-1).astype(jnp.float32), (N,)).reshape(rows, 1)
        mean_arr = jnp.tile(mean_c.reshape(-1).astype(jnp.float32), (N,)).reshape(rows, 1)
        params_per_row = True
    else:
        # Small spatial: fold channels into the lane axis so the output last
        # dim stays lane-dense (unmasked vst, contiguous DMA).  Params become
        # a (1, C*H*W) row broadcast across the sublane axis.
        rows, lanes = N, C * spatial
        x2d = x_nchw.reshape(rows, lanes)
        std_arr = jnp.repeat(std_c.reshape(-1).astype(jnp.float32), spatial).reshape(1, lanes)
        mean_arr = jnp.repeat(mean_c.reshape(-1).astype(jnp.float32), spatial).reshape(1, lanes)
        params_per_row = False

    # ---- joint tile sizing against a single byte budget ----
    max_tile_elems = max(pack * 128, target_tile_bytes // dtype_bytes)

    # Lane tile: full extent when moderate; otherwise the largest 128-multiple
    # the budget allows given the minimum row tile.
    if lanes <= 16384:
        lane_tile = lanes
    else:
        min_rows = rows if rows < pack else pack
        lane_tile = min(
            _round_down(lanes, 128),
            max(128, _round_down(max_tile_elems // min_rows, 128)),
        )

    # Row tile: whatever budget remains, aligned to the sublane pack factor.
    if rows <= pack:
        row_tile = rows
    else:
        row_budget = max(pack, max_tile_elems // lane_tile)
        row_tile = max(pack, _round_down(min(rows, row_budget), pack))

    # Megacore guard (v7x): tensors worth splitting must have >= 2 blocks on a
    # parallel axis so the second TensorCore isn't idle.
    total_bytes = rows * lanes * dtype_bytes
    if (total_bytes >= (1 << 20)
            and _cdiv(rows, row_tile) == 1 and _cdiv(lanes, lane_tile) == 1):
        if rows >= 2 * pack:
            row_tile = max(pack, _round_down(_cdiv(rows, 2), pack))
        elif lanes >= 256:
            lane_tile = max(128, _round_down(_cdiv(lanes, 2), 128))

    # Non-dividing shapes -> ceil-divided grids (partial edge blocks): padded
    # reads, dropped OOB writes; elementwise compute so padding never leaks.
    grid = (_cdiv(rows, row_tile), _cdiv(lanes, lane_tile))

    if params_per_row:
        # Params keyed on the OUTER axis only -> DMA'd once per row block.
        param_specs = [
            pl.BlockSpec((row_tile, 1), lambda i, j: (i, 0)),
            pl.BlockSpec((row_tile, 1), lambda i, j: (i, 0)),
        ]
        param_block_bytes = 2 * row_tile * 4
    else:
        # Tiny (1, lane_tile) f32 rows; negligible next to the data tile.
        param_specs = [
            pl.BlockSpec((1, lane_tile), lambda i, j: (0, j)),
            pl.BlockSpec((1, lane_tile), lambda i, j: (0, j)),
        ]
        param_block_bytes = 2 * lane_tile * 4

    # VMEM budget from the actual footprint: 2 buffers x (in + out) tile plus
    # double-buffered param blocks, with ~25% headroom; capped below v7x's
    # 64 MiB physical VMEM.
    tile_bytes = row_tile * lane_tile * dtype_bytes
    vmem_needed = 2 * (2 * tile_bytes) + 2 * param_block_bytes
    vmem_limit = int(min(56 << 20, max(16 << 20, vmem_needed * 5 // 4 + (1 << 20))))

    cost = pl.CostEstimate(
        flops=2 * rows * lanes,
        transcendentals=0,
        bytes_accessed=2 * rows * lanes * dtype_bytes + 2 * max(rows, lanes) * 4,
    )

    out2d = pl.pallas_call(
        _denorm_kernel,
        out_shape=jax.ShapeDtypeStruct((rows, lanes), dtype),
        grid_spec=pltpu.PrefetchScalarGridSpec(
            num_scalar_prefetch=0,
            grid=grid,
            in_specs=[pl.BlockSpec((row_tile, lane_tile), lambda i, j: (i, j))]
                     + param_specs,
            out_specs=pl.BlockSpec((row_tile, lane_tile), lambda i, j: (i, j)),
        ),
        compiler_params=pltpu.CompilerParams(
            dimension_semantics=("parallel", "parallel"),
            vmem_limit_bytes=vmem_limit,
        ),
        cost_estimate=cost,
    )(x2d, std_arr, mean_arr)

    # (rows, lanes) -> NCHW: again a pure reshape.
    return out2d.reshape(N, C, H, W)


if __name__ == "__main__":
    key = jax.random.PRNGKey(0)
    kx1, kx2 = jax.random.split(key)

    # Deterministic "module parameters" (the PyTorch __init__ just stores
    # whatever mean/std it is given); use per-channel constants.
    C = 4
    mean = jnp.array([0.485, 0.456, 0.406, 0.50], dtype=jnp.float32)
    std = jnp.array([0.229, 0.224, 0.225, 0.25], dtype=jnp.float32)

    # Case 1: H*W >= 128  -> (N*C, H*W) per-row-param path.
    N, H, W = 2, 16, 16
    x1 = jax.random.normal(kx1, (N, C, H, W), dtype=jnp.float32)
    out1 = jax.block_until_ready(custom_normalization(x1, mean, std))
    ref1 = x1 * std.reshape(1, C, 1, 1) + mean.reshape(1, C, 1, 1)
    assert out1.shape == (N, C, H, W)
    assert jnp.allclose(out1, ref1, atol=1e-6, rtol=1e-6)

    # Case 2: H*W < 128 -> lane-dense (N, C*H*W) path with per-lane params.
    N2, H2, W2 = 2, 8, 8
    x2 = jax.random.normal(kx2, (N2, C, H2, W2), dtype=jnp.float32)
    out2 = jax.block_until_ready(custom_normalization(x2, mean, std))
    ref2 = x2 * std.reshape(1, C, 1, 1) + mean.reshape(1, C, 1, 1)
    assert out2.shape == (N2, C, H2, W2)
    assert jnp.allclose(out2, ref2, atol=1e-6, rtol=1e-6)

    print("KERNEL_OK")
</pallas_src>

<mosaic_0001>
module attributes {stable_mosaic.version = 11 : i64} {
  func.func @_denorm_kernel(%arg0: i32, %arg1: i32, %arg2: memref<8x256xf32, #tpu.memory_space<vmem>>, %arg3: memref<8x1xf32, #tpu.memory_space<vmem>>, %arg4: memref<8x1xf32, #tpu.memory_space<vmem>>, %arg5: memref<8x256xf32, #tpu.memory_space<vmem>>) attributes {dimension_semantics = [#tpu.dimension_semantics<parallel>, #tpu.dimension_semantics<parallel>], iteration_bounds = array<i64: 1, 1>, scalar_prefetch = 0 : i64, scratch_operands = 0 : i64, tpu.core_type = #tpu.core_type<tc>, window_params = [{transform_indices = @transform_0, window_bounds = array<i64: 8, 256>}, {transform_indices = @transform_1, window_bounds = array<i64: 8, 1>}, {transform_indices = @transform_2, window_bounds = array<i64: 8, 1>}, {transform_indices = @transform_3, window_bounds = array<i64: 8, 256>}]} {
    %c0 = arith.constant 0 : index
    %c0_0 = arith.constant 0 : index
    %0 = vector.load %arg2[%c0, %c0_0] : memref<8x256xf32, #tpu.memory_space<vmem>>, vector<8x256xf32>
    %c0_1 = arith.constant 0 : index
    %c0_2 = arith.constant 0 : index
    %1 = vector.load %arg3[%c0_1, %c0_2] : memref<8x1xf32, #tpu.memory_space<vmem>>, vector<8x1xf32>
    %2 = vector.broadcast %1 : vector<8x1xf32> to vector<8x256xf32>
    %3 = arith.mulf %0, %2 : vector<8x256xf32>
    %c0_3 = arith.constant 0 : index
    %c0_4 = arith.constant 0 : index
    %4 = vector.load %arg4[%c0_3, %c0_4] : memref<8x1xf32, #tpu.memory_space<vmem>>, vector<8x1xf32>
    %5 = vector.broadcast %4 : vector<8x1xf32> to vector<8x256xf32>
    %6 = arith.addf %3, %5 : vector<8x256xf32>
    %c0_5 = arith.constant 0 : index
    %c0_6 = arith.constant 0 : index
    %7 = vector.load %arg5[%c0_5, %c0_6] : memref<8x256xf32, #tpu.memory_space<vmem>>, vector<8x256xf32>
    tpu.vector_store %arg5[%c0_5, %c0_6], %6 {strides = array<i32>} : memref<8x256xf32, #tpu.memory_space<vmem>>, vector<8x256xf32>,
    return
  }
  func.func @transform_0(%arg0: i32, %arg1: i32) -> (i32, i32) {
    %c0_i32 = arith.constant 0 : i32
    return %arg0, %arg1 : i32, i32
  }
  func.func @transform_1(%arg0: i32, %arg1: i32) -> (i32, i32) {
    %c0_i32 = arith.constant 0 : i32
    %c0_i32_0 = arith.constant 0 : i32
    return %arg0, %c0_i32 : i32, i32
  }
  func.func @transform_2(%arg0: i32, %arg1: i32) -> (i32, i32) {
    %c0_i32 = arith.constant 0 : i32
    %c0_i32_0 = arith.constant 0 : i32
    return %arg0, %c0_i32 : i32, i32
  }
  func.func @transform_3(%arg0: i32, %arg1: i32) -> (i32, i32) {
    %c0_i32 = arith.constant 0 : i32
    return %arg0, %arg1 : i32, i32
  }
}

</mosaic_0001>

<llo_original>
// kernel: tpu_custom_call.1
$region0: #{tpu_custom_call.1}
  #allocation0 [shape = 'u32[]', space=smem, size = 0x4, offset = 0x4, fixed_abs, tag = 'smem constant byte address 0x4 - core index']
  #allocation1 [shape = 'u32[144,128]{1,0:T(1,128)}', space=vmem, size = 0x12000, scoped, tag = 'internal scratch']
  %s0 = inlined_call_operand.vmem [shape: f32[8,256], index: 0, kind: input, shape index: {}]
  %s1 = inlined_call_operand.vmem [shape: f32[8,1], index: 1, kind: input, shape index: {}]
  %s2 = inlined_call_operand.vmem [shape: f32[8,1], index: 2, kind: input, shape index: {}]
  %s3 = inlined_call_operand.hbm [shape: f32[8,256], index: 3, kind: output, shape index: {}]
  %s4 = sld [smem:[#allocation0]]
  $region22: #{tpu_custom_call.1} parent=0
    _
  %s6 = ssub.s32 1, %s4
  %s7 = scalar_select 0, %s6, %s4
  $region1: #{tpu_custom_call.1} parent=0
    #allocation2 [shape = 'u8[8192]{0}', space=vmem, size = 0x2000, scoped, tag = 'output window, operand 0, single buffered']
    #allocation3 [shape = 's32[1]{0}', space=sflag, size = 0x4, scoped, tag = 'scoped memory for tpu_custom_call.1']
    %8 = vsyncpa [#allocation3], 0
    // Predicated region
    $region2: #{tpu_custom_call.1} parent=1 // pred_check
      _
    $region3: #{tpu_custom_call.1} parent=1 // pred_check_branch
      %10 = sbr.rel (0) target = $region5
    $region4: #{tpu_custom_call.1} parent=1 // pred_region
      _
    $region5: #{tpu_custom_call.1} parent=1 // pred_fallthru
      _
    // Predicated region
    $region6: #{tpu_custom_call.1} parent=1 // pred_check
      _
    $region7: #{tpu_custom_call.1} parent=1 // pred_check_branch
      %12 = sbr.rel (0) target = $region9
    $region8: #{tpu_custom_call.1} parent=1 // pred_region
      _
    $region9: #{tpu_custom_call.1} parent=1 // pred_fallthru
      _
    // Predicated region
    $region10: #{tpu_custom_call.1} parent=1 // pred_check
      _
    $region11: #{tpu_custom_call.1} parent=1 // pred_check_branch
      %14 = sbr.rel (0) target = $region13
    $region12: #{tpu_custom_call.1} parent=1 // pred_region
      _
    $region13: #{tpu_custom_call.1} parent=1 // pred_fallthru
      _
    %v15 = vld [vmem:[%s0] sm:$0xff]
    %v16 = vld [vmem:[%s0 + $0x8] sm:$0xff]
    %v17 = vld [vmem:[%s1] sm:$0xff]
    %19 = vset.pattern.permute.xlu0 0
    %20 = vperm.xlu0 %19, %v17
    %v21 = vpop.permute.xlu0 %20
    %v23 = vmul.f32 %v15, %v21
    %v24 = vmul.f32 %v16, %v21
    %v25 = vld [vmem:[%s2] sm:$0xff]
    %27 = vset.pattern.permute.xlu0 0
    %28 = vperm.xlu0 %27, %v25
    %v29 = vpop.permute.xlu0 %28
    %v31 = vadd.f32 %v23, %v29
    %v32 = vadd.f32 %v24, %v29
    %33 = vst [vmem:[#allocation2] sm:$0xff] %v31
    %34 = vst [vmem:[#allocation2 + $0x8] sm:$0xff] %v32
    // Predicated region
    $region14: #{tpu_custom_call.1} parent=1 // pred_check
      _
    $region15: #{tpu_custom_call.1} parent=1 // pred_check_branch
      %36 = sbr.rel (0) target = $region17
    $region16: #{tpu_custom_call.1} parent=1 // pred_region
      %s38 = ssub.s32 256, 256
      %39 = vsyncadd [#allocation3], %s38
      %s41 = sshll.u32 [#allocation2], 4
      %s42 = int_to_ptr.vmem [resolvable:$true] %s41
      %44 = dma.vmem_to_hbm [thread:$0]  %s42, 256, %s3, [#allocation3]
    $region17: #{tpu_custom_call.1} parent=1 // pred_fallthru
      _
    // Predicated region
    $region18: #{tpu_custom_call.1} parent=1 // pred_check
      _
    $region19: #{tpu_custom_call.1} parent=1 // pred_check_branch
      %46 = sbr.rel (0) target = $region21
    $region20: #{tpu_custom_call.1} parent=1 // pred_region
      %47 = dma.done [#allocation3], 256
    $region21: #{tpu_custom_call.1} parent=1 // pred_fallthru
      _
    %48 = vsyncpa [#allocation3], 1

</llo_original>
